<compile_context>
chip_gen: v7x
topology: tpu7x:2x2x1
jax: 0.10.0
libtpu: 0.0.40
codegen_flags: <defaults>
</compile_context>

<pallas_src>
import functools

import jax
import jax.numpy as jnp
from jax.experimental import pallas as pl
from jax.experimental.pallas import tpu as pltpu


def _gconvgru_kernel(
    x_ref, h_ref,
    wx_ref,       # [f, 3h]  : [Wxz | Wxr | Wxh]
    whzr_ref,     # [h, 2h]  : [Whz | Whr]   (candidate h-path goes via whh)
    b_ref,        # [1, 3h]  : [bz | br | bh]
    whh_ref,      # [h, h]
    wlin_ref,     # [h, o]
    blin_ref,     # [1, o]
    out_ref,      # [tile_n, o]
    hnew_ref,     # [tile_n, h]
):
    """Fused GConvGRU(K=1) cell + output Linear for one tile of node rows."""
    x = x_ref[...]
    h = h_ref[...]
    hd = h_ref.shape[-1]

    # X-path pre-activations for all three gates in one lane-dense MXU pass.
    pre_x = jnp.dot(x, wx_ref[...], preferred_element_type=jnp.float32) + b_ref[...]

    # Z|R: add the H-path (K=h, N=2h) and run ONE EUP sigmoid pass over the
    # packed [tile_n, 2h] slab, then split in-vreg.
    zr = jax.nn.sigmoid(
        pre_x[:, : 2 * hd]
        + jnp.dot(h, whzr_ref[...], preferred_element_type=jnp.float32)
    )
    z = zr[:, :hd]
    r = zr[:, hd:]

    # Candidate state: tanh(X Wxh + bh + (H*R) Whh)
    cand = jnp.tanh(
        pre_x[:, 2 * hd:]
        + jnp.dot(h * r, whh_ref[...], preferred_element_type=jnp.float32)
    )

    h_new = z * h + (1.0 - z) * cand

    # Output head: Linear(hidden, output)
    out = (
        jnp.dot(h_new, wlin_ref[...], preferred_element_type=jnp.float32)
        + blin_ref[...]
    )

    # Single full-ref store per output (no sub-slab stores).
    out_ref[...] = out.astype(out_ref.dtype)
    hnew_ref[...] = h_new.astype(hnew_ref.dtype)


def init_params(key, node_features, hidden_size, output_size):
    """Deterministic synthetic params in the fused [in, out] layout.

    Porting PyTorch weights: transpose each weight to [in, out], concatenate
    the gate weights column-wise as below, and SUM the x-conv and h-conv
    biases of each gate (semantically identical to keeping them separate).
    """
    ks = jax.random.split(key, 11)
    f, hd, o = node_features, hidden_size, output_size
    sx, sh = 1.0 / jnp.sqrt(f), 1.0 / jnp.sqrt(hd)

    def w(k, shape, scale):
        return scale * jax.random.normal(k, shape, dtype=jnp.float32)

    wxz, wxr, wxh = w(ks[0], (f, hd), sx), w(ks[1], (f, hd), sx), w(ks[2], (f, hd), sx)
    whz, whr, whh = w(ks[3], (hd, hd), sh), w(ks[4], (hd, hd), sh), w(ks[5], (hd, hd), sh)
    bz, br, bh = w(ks[6], (1, hd), sx), w(ks[7], (1, hd), sx), w(ks[8], (1, hd), sx)
    wlin, blin = w(ks[9], (hd, o), sh), w(ks[10], (1, o), sh)

    return dict(
        wx_cat=jnp.concatenate([wxz, wxr, wxh], axis=1),   # [f, 3h]
        wh_zr=jnp.concatenate([whz, whr], axis=1),          # [h, 2h] (no zero block)
        b_cat=jnp.concatenate([bz, br, bh], axis=1),        # [1, 3h]
        whh=whh,                                             # [h, h]
        wlin=wlin, blin=blin,                                # [h, o], [1, o]
    )


def _round_up(x, m):
    return (x + m - 1) // m * m


def _pick_tile(n):
    """Large tiles (amortize ~0.35us/step), >=2 grid steps once n is big
    enough (v7x megacore), second-minor dim kept a multiple of 8."""
    if n <= 1024:
        return _round_up(n, 8)
    return min(4096, _round_up(pl.cdiv(n, 2), 8))


@functools.partial(jax.jit, static_argnames=("hidden_size",))
def tgnn_forward(x, edge_index, edge_weight, h, params, *, hidden_size):
    """TGNNWrapper.forward: returns (out, h_new).

    edge_index / edge_weight are mathematically inert because ChebConv with
    K=1 only applies the identity (T_0) term -- exact for the default config.
    """
    del edge_index, edge_weight
    n, f = x.shape
    hd = hidden_size
    if h is None:  # GConvGRU._set_hidden_state
        h = jnp.zeros((n, hd), dtype=jnp.float32)
    o = params["wlin"].shape[1]

    tile_n = _pick_tile(n)
    grid = (pl.cdiv(n, tile_n),)   # ragged last block masked by Pallas; no jnp.pad

    def row(last):           # node-row-tiled operand
        return pl.BlockSpec((tile_n, last), lambda i: (i, 0))

    def resident(shape):     # weights: same block every grid step -> VMEM-resident
        return pl.BlockSpec(shape, lambda i: (0, 0))

    cost = pl.CostEstimate(
        flops=2 * n * (f * 3 * hd + hd * 2 * hd + hd * hd + hd * o),
        transcendentals=3 * n * hd,
        bytes_accessed=4 * (
            n * (f + hd)                     # x, h reads
            + n * (hd + o)                   # h_new, out writes
            + f * 3 * hd + hd * 2 * hd + 3 * hd
            + hd * hd + hd * o + o
        ),
    )

    out, h_new = pl.pallas_call(
        _gconvgru_kernel,
        out_shape=(
            jax.ShapeDtypeStruct((n, o), jnp.float32),    # out
            jax.ShapeDtypeStruct((n, hd), jnp.float32),   # h_new (aliased to h)
        ),
        grid=grid,
        in_specs=[
            row(f),                          # x
            row(hd),                         # h
            resident((f, 3 * hd)),           # wx_cat
            resident((hd, 2 * hd)),          # wh_zr
            resident((1, 3 * hd)),           # b_cat
            resident((hd, hd)),              # whh
            resident((hd, o)),               # wlin
            resident((1, o)),                # blin
        ],
        out_specs=[
            row(o),
            row(hd),
        ],
        input_output_aliases={1: 1},         # h (input 1) -> h_new (output 1)
        compiler_params=pltpu.CompilerParams(
            dimension_semantics=("parallel",),   # megacore sharding on v7x
        ),
        cost_estimate=cost,
    )(
        x, h,
        params["wx_cat"], params["wh_zr"], params["b_cat"],
        params["whh"], params["wlin"], params["blin"],
    )
    return out, h_new


def _reference(x, h, p):
    """Pure-JAX reference (same fused weight layout) for correctness check."""
    hd = h.shape[-1]
    pre_x = x @ p["wx_cat"] + p["b_cat"]
    zr = jax.nn.sigmoid(pre_x[:, : 2 * hd] + h @ p["wh_zr"])
    z, r = zr[:, :hd], zr[:, hd:]
    cand = jnp.tanh(pre_x[:, 2 * hd:] + (h * r) @ p["whh"])
    h_new = z * h + (1.0 - z) * cand
    out = h_new @ p["wlin"] + p["blin"]
    return out, h_new


if __name__ == "__main__":
    # Small shapes consistent with the module defaults:
    # num_nodes=64, node_features=8, hidden_size=32, output_size=8.
    num_nodes, node_features, hidden_size, output_size = 64, 8, 32, 8

    key = jax.random.PRNGKey(0)
    k_x, k_h, k_p, k_e = jax.random.split(key, 4)

    x = jax.random.normal(k_x, (num_nodes, node_features), dtype=jnp.float32)
    h0 = jax.random.normal(k_h, (num_nodes, hidden_size), dtype=jnp.float32)
    # Edge structure (no effect for K=1 ChebConv; kept for signature parity).
    num_edges = 128
    edge_index = jax.random.randint(k_e, (2, num_edges), 0, num_nodes, dtype=jnp.int32)
    edge_weight = jnp.ones((num_edges,), dtype=jnp.float32)

    params = init_params(k_p, node_features, hidden_size, output_size)

    out, h_new = tgnn_forward(
        x, edge_index, edge_weight, h0, params, hidden_size=hidden_size
    )
    out = jax.block_until_ready(out)
    h_new = jax.block_until_ready(h_new)

    out_ref, hnew_ref = _reference(x, h0, params)
    assert jnp.allclose(out, out_ref, atol=1e-4, rtol=1e-4)
    assert jnp.allclose(h_new, hnew_ref, atol=1e-4, rtol=1e-4)

    # Second check: exercises the multi-tile + ragged-last-block + aliasing path.
    n2 = 1100
    k_x2, k_h2 = jax.random.split(jax.random.PRNGKey(1), 2)
    x2 = jax.random.normal(k_x2, (n2, node_features), dtype=jnp.float32)
    h2 = jax.random.normal(k_h2, (n2, hidden_size), dtype=jnp.float32)
    out2, hnew2 = tgnn_forward(
        x2, edge_index, edge_weight, h2, params, hidden_size=hidden_size
    )
    out2 = jax.block_until_ready(out2)
    hnew2 = jax.block_until_ready(hnew2)
    out2_ref, hnew2_ref = _reference(x2, h2, params)
    assert jnp.allclose(out2, out2_ref, atol=1e-4, rtol=1e-4)
    assert jnp.allclose(hnew2, hnew2_ref, atol=1e-4, rtol=1e-4)

    print("KERNEL_OK")
</pallas_src>

<mosaic_0001>
module attributes {stable_mosaic.version = 11 : i64} {
  func.func @_gconvgru_kernel(%arg0: i32, %arg1: memref<64x8xf32, #tpu.memory_space<vmem>>, %arg2: memref<64x32xf32, #tpu.memory_space<vmem>>, %arg3: memref<8x96xf32, #tpu.memory_space<vmem>>, %arg4: memref<32x64xf32, #tpu.memory_space<vmem>>, %arg5: memref<1x96xf32, #tpu.memory_space<vmem>>, %arg6: memref<32x32xf32, #tpu.memory_space<vmem>>, %arg7: memref<32x8xf32, #tpu.memory_space<vmem>>, %arg8: memref<1x8xf32, #tpu.memory_space<vmem>>, %arg9: memref<64x8xf32, #tpu.memory_space<vmem>>, %arg10: memref<64x32xf32, #tpu.memory_space<vmem>>) attributes {dimension_semantics = [#tpu.dimension_semantics<parallel>], iteration_bounds = array<i64: 1>, scalar_prefetch = 0 : i64, scratch_operands = 0 : i64, tpu.core_type = #tpu.core_type<tc>, window_params = [{transform_indices = @transform_0, window_bounds = array<i64: 64, 8>}, {transform_indices = @transform_1, window_bounds = array<i64: 64, 32>}, {pipeline_mode = #tpu.pipeline_mode<synchronous>, transform_indices = @transform_2, window_bounds = array<i64: 8, 96>}, {pipeline_mode = #tpu.pipeline_mode<synchronous>, transform_indices = @transform_3, window_bounds = array<i64: 32, 64>}, {pipeline_mode = #tpu.pipeline_mode<synchronous>, transform_indices = @transform_4, window_bounds = array<i64: 1, 96>}, {pipeline_mode = #tpu.pipeline_mode<synchronous>, transform_indices = @transform_5, window_bounds = array<i64: 32, 32>}, {pipeline_mode = #tpu.pipeline_mode<synchronous>, transform_indices = @transform_6, window_bounds = array<i64: 32, 8>}, {pipeline_mode = #tpu.pipeline_mode<synchronous>, transform_indices = @transform_7, window_bounds = array<i64: 1, 8>}, {transform_indices = @transform_8, window_bounds = array<i64: 64, 8>}, {transform_indices = @transform_9, window_bounds = array<i64: 64, 32>}]} {
    %c0 = arith.constant 0 : index
    %c0_0 = arith.constant 0 : index
    %0 = vector.load %arg1[%c0, %c0_0] : memref<64x8xf32, #tpu.memory_space<vmem>>, vector<64x8xf32>
    %c0_1 = arith.constant 0 : index
    %c0_2 = arith.constant 0 : index
    %1 = vector.load %arg2[%c0_1, %c0_2] : memref<64x32xf32, #tpu.memory_space<vmem>>, vector<64x32xf32>
    %c0_3 = arith.constant 0 : index
    %c0_4 = arith.constant 0 : index
    %2 = vector.load %arg3[%c0_3, %c0_4] : memref<8x96xf32, #tpu.memory_space<vmem>>, vector<8x96xf32>
    %cst = arith.constant dense<0.000000e+00> : vector<64x96xf32>
    %3 = tpu.matmul %0, %2, %cst {dimension_numbers = #tpu.dot_dimension_numbers<[1], [0], [0], [1], [0, 0, 1, 1], [], []>} : vector<64x8xf32>, vector<8x96xf32>, vector<64x96xf32> -> vector<64x96xf32>
    %c0_5 = arith.constant 0 : index
    %c0_6 = arith.constant 0 : index
    %4 = vector.load %arg5[%c0_5, %c0_6] : memref<1x96xf32, #tpu.memory_space<vmem>>, vector<1x96xf32>
    %5 = vector.broadcast %4 : vector<1x96xf32> to vector<64x96xf32>
    %6 = arith.addf %3, %5 : vector<64x96xf32>
    %7 = vector.extract_strided_slice %6 {offsets = [0, 0], sizes = [64, 64], strides = [1, 1]} : vector<64x96xf32> to vector<64x64xf32>
    %c0_7 = arith.constant 0 : index
    %c0_8 = arith.constant 0 : index
    %8 = vector.load %arg4[%c0_7, %c0_8] : memref<32x64xf32, #tpu.memory_space<vmem>>, vector<32x64xf32>
    %cst_9 = arith.constant dense<0.000000e+00> : vector<64x64xf32>
    %9 = tpu.matmul %1, %8, %cst_9 {dimension_numbers = #tpu.dot_dimension_numbers<[1], [0], [0], [1], [0, 0, 1, 1], [], []>} : vector<64x32xf32>, vector<32x64xf32>, vector<64x64xf32> -> vector<64x64xf32>
    %10 = arith.addf %7, %9 : vector<64x64xf32>
    %11 = arith.negf %10 : vector<64x64xf32>
    %12 = math.exp %11 : vector<64x64xf32>
    %cst_10 = arith.constant 1.000000e+00 : f32
    %13 = vector.broadcast %cst_10 : f32 to vector<64x64xf32>
    %14 = arith.addf %13, %12 : vector<64x64xf32>
    %15 = arith.divf %13, %14 : vector<64x64xf32>
    %16 = vector.extract_strided_slice %15 {offsets = [0, 0], sizes = [64, 32], strides = [1, 1]} : vector<64x64xf32> to vector<64x32xf32>
    %17 = vector.extract_strided_slice %15 {offsets = [0, 32], sizes = [64, 32], strides = [1, 1]} : vector<64x64xf32> to vector<64x32xf32>
    %18 = vector.extract_strided_slice %6 {offsets = [0, 64], sizes = [64, 32], strides = [1, 1]} : vector<64x96xf32> to vector<64x32xf32>
    %19 = arith.mulf %1, %17 : vector<64x32xf32>
    %c0_11 = arith.constant 0 : index
    %c0_12 = arith.constant 0 : index
    %20 = vector.load %arg6[%c0_11, %c0_12] : memref<32x32xf32, #tpu.memory_space<vmem>>, vector<32x32xf32>
    %cst_13 = arith.constant dense<0.000000e+00> : vector<64x32xf32>
    %21 = tpu.matmul %19, %20, %cst_13 {dimension_numbers = #tpu.dot_dimension_numbers<[1], [0], [0], [1], [0, 0, 1, 1], [], []>} : vector<64x32xf32>, vector<32x32xf32>, vector<64x32xf32> -> vector<64x32xf32>
    %22 = arith.addf %18, %21 : vector<64x32xf32>
    %23 = math.tanh %22 : vector<64x32xf32>
    %24 = arith.mulf %16, %1 : vector<64x32xf32>
    %cst_14 = arith.constant 1.000000e+00 : f32
    %25 = vector.broadcast %cst_14 : f32 to vector<64x32xf32>
    %26 = arith.subf %25, %16 : vector<64x32xf32>
    %27 = arith.mulf %26, %23 : vector<64x32xf32>
    %28 = arith.addf %24, %27 : vector<64x32xf32>
    %c0_15 = arith.constant 0 : index
    %c0_16 = arith.constant 0 : index
    %29 = vector.load %arg7[%c0_15, %c0_16] : memref<32x8xf32, #tpu.memory_space<vmem>>, vector<32x8xf32>
    %cst_17 = arith.constant dense<0.000000e+00> : vector<64x8xf32>
    %30 = tpu.matmul %28, %29, %cst_17 {dimension_numbers = #tpu.dot_dimension_numbers<[1], [0], [0], [1], [0, 0, 1, 1], [], []>} : vector<64x32xf32>, vector<32x8xf32>, vector<64x8xf32> -> vector<64x8xf32>
    %c0_18 = arith.constant 0 : index
    %c0_19 = arith.constant 0 : index
    %31 = vector.load %arg8[%c0_18, %c0_19] : memref<1x8xf32, #tpu.memory_space<vmem>>, vector<1x8xf32>
    %32 = vector.broadcast %31 : vector<1x8xf32> to vector<64x8xf32>
    %33 = arith.addf %30, %32 : vector<64x8xf32>
    %c0_20 = arith.constant 0 : index
    %c0_21 = arith.constant 0 : index
    %34 = vector.load %arg9[%c0_20, %c0_21] : memref<64x8xf32, #tpu.memory_space<vmem>>, vector<64x8xf32>
    tpu.vector_store %arg9[%c0_20, %c0_21], %33 {strides = array<i32>} : memref<64x8xf32, #tpu.memory_space<vmem>>, vector<64x8xf32>,
    %c0_22 = arith.constant 0 : index
    %c0_23 = arith.constant 0 : index
    %35 = vector.load %arg10[%c0_22, %c0_23] : memref<64x32xf32, #tpu.memory_space<vmem>>, vector<64x32xf32>
    tpu.vector_store %arg10[%c0_22, %c0_23], %28 {strides = array<i32>} : memref<64x32xf32, #tpu.memory_space<vmem>>, vector<64x32xf32>,
    return
  }
  func.func @transform_0(%arg0: i32) -> (i32, i32) {
    %c0_i32 = arith.constant 0 : i32
    %c0_i32_0 = arith.constant 0 : i32
    return %arg0, %c0_i32 : i32, i32
  }
  func.func @transform_1(%arg0: i32) -> (i32, i32) {
    %c0_i32 = arith.constant 0 : i32
    %c0_i32_0 = arith.constant 0 : i32
    return %arg0, %c0_i32 : i32, i32
  }
  func.func @transform_2(%arg0: i32) -> (i32, i32) {
    %c0_i32 = arith.constant 0 : i32
    %c0_i32_0 = arith.constant 0 : i32
    %c0_i32_1 = arith.constant 0 : i32
    return %c0_i32, %c0_i32_0 : i32, i32
  }
  func.func @transform_3(%arg0: i32) -> (i32, i32) {
    %c0_i32 = arith.constant 0 : i32
    %c0_i32_0 = arith.constant 0 : i32
    %c0_i32_1 = arith.constant 0 : i32
    return %c0_i32, %c0_i32_0 : i32, i32
  }
  func.func @transform_4(%arg0: i32) -> (i32, i32) {
    %c0_i32 = arith.constant 0 : i32
    %c0_i32_0 = arith.constant 0 : i32
    %c0_i32_1 = arith.constant 0 : i32
    return %c0_i32, %c0_i32_0 : i32, i32
  }
  func.func @transform_5(%arg0: i32) -> (i32, i32) {
    %c0_i32 = arith.constant 0 : i32
    %c0_i32_0 = arith.constant 0 : i32
    %c0_i32_1 = arith.constant 0 : i32
    return %c0_i32, %c0_i32_0 : i32, i32
  }
  func.func @transform_6(%arg0: i32) -> (i32, i32) {
    %c0_i32 = arith.constant 0 : i32
    %c0_i32_0 = arith.constant 0 : i32
    %c0_i32_1 = arith.constant 0 : i32
    return %c0_i32, %c0_i32_0 : i32, i32
  }
  func.func @transform_7(%arg0: i32) -> (i32, i32) {
    %c0_i32 = arith.constant 0 : i32
    %c0_i32_0 = arith.constant 0 : i32
    %c0_i32_1 = arith.constant 0 : i32
    return %c0_i32, %c0_i32_0 : i32, i32
  }
  func.func @transform_8(%arg0: i32) -> (i32, i32) {
    %c0_i32 = arith.constant 0 : i32
    %c0_i32_0 = arith.constant 0 : i32
    return %arg0, %c0_i32 : i32, i32
  }
  func.func @transform_9(%arg0: i32) -> (i32, i32) {
    %c0_i32 = arith.constant 0 : i32
    %c0_i32_0 = arith.constant 0 : i32
    return %arg0, %c0_i32 : i32, i32
  }
}

</mosaic_0001>

<llo_original>
// kernel: tgnn_forward.1
$region0: #{tgnn_forward.1}
  #allocation0 [shape = 'u32[]', space=smem, size = 0x4, offset = 0x4, fixed_abs, tag = 'smem constant byte address 0x4 - core index']
  #allocation1 [shape = 'u32[144,128]{1,0:T(1,128)}', space=vmem, size = 0x12000, scoped, tag = 'internal scratch']
  %s0 = inlined_call_operand.vmem [shape: f32[64,8], index: 0, kind: input, shape index: {}]
  %s1 = inlined_call_operand.vmem [shape: f32[64,32], index: 1, kind: input, shape index: {}, may-alias: {1,9}]
  %s2 = inlined_call_operand.vmem [shape: f32[8,96], index: 2, kind: input, shape index: {}]
  %s3 = inlined_call_operand.vmem [shape: f32[32,64], index: 3, kind: input, shape index: {}]
  %s4 = inlined_call_operand.vmem [shape: f32[1,96], index: 4, kind: input, shape index: {}]
  %s5 = inlined_call_operand.vmem [shape: f32[32,32], index: 5, kind: input, shape index: {}]
  %s6 = inlined_call_operand.vmem [shape: f32[32,8], index: 6, kind: input, shape index: {}]
  %s7 = inlined_call_operand.vmem [shape: f32[1,8], index: 7, kind: input, shape index: {}]
  %s8 = inlined_call_operand.vmem [shape: f32[64,8], index: 8, kind: output, shape index: {0}]
  %s9 = inlined_call_operand.vmem [shape: f32[64,32], index: 9, kind: output, shape index: {1}, may-alias: {1,9}]
  %10 = xla_tuple %s8, %s9
  %s11 = sld [smem:[#allocation0]]
  $region50: #{tgnn_forward.1} parent=0
    _
  %s13 = ssub.s32 1, %s11
  %s14 = scalar_select 0, %s13, %s11
  // Predicated region
  $region2: #{tgnn_forward.1} parent=0 // pred_check
    _
  $region3: #{tgnn_forward.1} parent=0 // pred_check_branch
    %16 = sbr.rel (0) target = $region5
  $region4: #{tgnn_forward.1} parent=0 // pred_region
    _
  $region5: #{tgnn_forward.1} parent=0 // pred_fallthru
    _
  // Predicated region
  $region6: #{tgnn_forward.1} parent=0 // pred_check
    _
  $region7: #{tgnn_forward.1} parent=0 // pred_check_branch
    %18 = sbr.rel (0) target = $region9
  $region8: #{tgnn_forward.1} parent=0 // pred_region
    _
  $region9: #{tgnn_forward.1} parent=0 // pred_fallthru
    _
  // Predicated region
  $region10: #{tgnn_forward.1} parent=0 // pred_check
    _
  $region11: #{tgnn_forward.1} parent=0 // pred_check_branch
    %20 = sbr.rel (0) target = $region13
  $region12: #{tgnn_forward.1} parent=0 // pred_region
    _
  $region13: #{tgnn_forward.1} parent=0 // pred_fallthru
    _
  // Predicated region
  $region14: #{tgnn_forward.1} parent=0 // pred_check
    _
  $region15: #{tgnn_forward.1} parent=0 // pred_check_branch
    %22 = sbr.rel (0) target = $region17
  $region16: #{tgnn_forward.1} parent=0 // pred_region
    _
  $region17: #{tgnn_forward.1} parent=0 // pred_fallthru
    _
  // Predicated region
  $region18: #{tgnn_forward.1} parent=0 // pred_check
    _
  $region19: #{tgnn_forward.1} parent=0 // pred_check_branch
    %24 = sbr.rel (0) target = $region21
  $region20: #{tgnn_forward.1} parent=0 // pred_region
    _
  $region21: #{tgnn_forward.1} parent=0 // pred_fallthru
    _
  // Predicated region
  $region22: #{tgnn_forward.1} parent=0 // pred_check
    _
  $region23: #{tgnn_forward.1} parent=0 // pred_check_branch
    %26 = sbr.rel (0) target = $region25
  $region24: #{tgnn_forward.1} parent=0 // pred_region
    _
  $region25: #{tgnn_forward.1} parent=0 // pred_fallthru
    _
  // Predicated region
  $region26: #{tgnn_forward.1} parent=0 // pred_check
    _
  $region27: #{tgnn_forward.1} parent=0 // pred_check_branch
    %28 = sbr.rel (0) target = $region29
  $region28: #{tgnn_forward.1} parent=0 // pred_region
    _
  $region29: #{tgnn_forward.1} parent=0 // pred_fallthru
    _
  // Predicated region
  $region30: #{tgnn_forward.1} parent=0 // pred_check
    _
  $region31: #{tgnn_forward.1} parent=0 // pred_check_branch
    %30 = sbr.rel (0) target = $region33
  $region32: #{tgnn_forward.1} parent=0 // pred_region
    _
  $region33: #{tgnn_forward.1} parent=0 // pred_fallthru
    _
  %v31 = vld [vmem:[%s0] sm:$0xff]
  %v32 = vld [vmem:[%s0 + $0x8] sm:$0xff]
  %v33 = vld [vmem:[%s0 + $0x10] sm:$0xff]
  %v34 = vld [vmem:[%s0 + $0x18] sm:$0xff]
  %v35 = vld [vmem:[%s0 + $0x20] sm:$0xff]
  %v36 = vld [vmem:[%s0 + $0x28] sm:$0xff]
  %v37 = vld [vmem:[%s0 + $0x30] sm:$0xff]
  %v38 = vld [vmem:[%s0 + $0x38] sm:$0xff]
  %v39 = vld [vmem:[%s1] sm:$0xff]
  %v40 = vld [vmem:[%s1 + $0x8] sm:$0xff]
  %v41 = vld [vmem:[%s1 + $0x10] sm:$0xff]
  %v42 = vld [vmem:[%s1 + $0x18] sm:$0xff]
  %v43 = vld [vmem:[%s1 + $0x20] sm:$0xff]
  %v44 = vld [vmem:[%s1 + $0x28] sm:$0xff]
  %v45 = vld [vmem:[%s1 + $0x30] sm:$0xff]
  %v46 = vld [vmem:[%s1 + $0x38] sm:$0xff]
  %v47 = vld [vmem:[%s2] sm:$0xff]
  %v48 = vld [vmem:[%s4] sm:$0x1]
  %v50 = vlaneseq
  %v51 = vshrl.u32 %v50, 7
  %v52 = vsub.s32 0, %v51
  %v53 = vrot.slane %v48, %v52
  %vm55 = vcmask 64512
  %v57 = vsel %vm55, %v31, 0
  %v60 = vsel %vm55, %v32, 0
  %v63 = vsel %vm55, %v33, 0
  %v66 = vsel %vm55, %v34, 0
  %v69 = vsel %vm55, %v35, 0
  %v72 = vsel %vm55, %v36, 0
  %v75 = vsel %vm55, %v37, 0
  %v78 = vsel %vm55, %v38, 0
  %80 = vmatprep.subr.mxu0 0.0
  %81 = vmatpush1.msra.mxu0 %v47
  %82 = vmatprep.subr.mxu0 0.0
  %83 = vmatpush1.msra.mxu0 0.0
  %84 = vmatprep.subr.mxu0 0.0
  %85 = vmatpush1.msra.mxu0 0.0
  %86 = vmatprep.subr.mxu0 0.0
  %87 = vmatpush1.msra.mxu0 0.0
  %88 = vmatprep.subr.mxu0 0.0
  %89 = vmatpush1.msra.mxu0 0.0
  %90 = vmatprep.subr.mxu0 0.0
  %91 = vmatpush1.msra.mxu0 0.0
  %92 = vmatprep.subr.mxu0 0.0
  %93 = vmatpush1.msra.mxu0 0.0
  %94 = vmatprep.subr.mxu0 0.0
  %95 = vmatpush1.msra.mxu0 0.0
  %96 = vmatprep.subr.mxu0 0.0
  %97 = vmatpush1.msra.mxu0 0.0
  %98 = vmatprep.subr.mxu0 0.0
  %99 = vmatpush1.msra.mxu0 0.0
  %100 = vmatprep.subr.mxu0 0.0
  %101 = vmatpush1.msra.mxu0 0.0
  %102 = vmatprep.subr.mxu0 0.0
  %103 = vmatpush1.msra.mxu0 0.0
  %104 = vmatprep.subr.mxu0 0.0
  %105 = vmatpush1.msra.mxu0 0.0
  %106 = vmatprep.subr.mxu0 0.0
  %107 = vmatpush1.msra.mxu0 0.0
  %108 = vmatprep.subr.mxu0 0.0
  %109 = vmatpush1.msra.mxu0 0.0
  %110 = vmatprep.subr.mxu0 0.0
  %111 = vmatpush1.msra.mxu0 0.0
  %112 = vmatprep.subr.mxu0 0.0
  %113 = vmatpush1.msra.mxu0 0.0
  %114 = vmatprep.subr.mxu0 0.0
  %115 = vmatpush1.msra.mxu0 0.0
  %116 = vmatprep.subr.mxu0 0.0
  %117 = vmatpush1.msra.mxu0 0.0
  %118 = vmatprep.subr.mxu0 0.0
  %119 = vmatpush1.msra.mxu0 0.0
  %120 = vmatprep.subr.mxu0 0.0
  %121 = vmatpush1.msra.mxu0 0.0
  %122 = vmatprep.subr.mxu0 0.0
  %123 = vmatpush1.msra.mxu0 0.0
  %124 = vmatprep.subr.mxu0 0.0
  %125 = vmatpush1.msra.mxu0 0.0
  %126 = vmatprep.subr.mxu0 0.0
  %127 = vmatpush1.msra.mxu0 0.0
  %128 = vmatprep.subr.mxu0 0.0
  %129 = vmatpush1.msra.mxu0 0.0
  %130 = vmatprep.subr.mxu0 0.0
  %131 = vmatpush1.msra.mxu0 0.0
  %132 = vmatprep.subr.mxu0 0.0
  %133 = vmatpush1.msra.mxu0 0.0
  %134 = vmatprep.subr.mxu0 0.0
  %135 = vmatpush1.msra.mxu0 0.0
  %136 = vmatprep.subr.mxu0 0.0
  %137 = vmatpush1.msra.mxu0 0.0
  %138 = vmatprep.subr.mxu0 0.0
  %139 = vmatpush1.msra.mxu0 0.0
  %140 = vmatprep.subr.mxu0 0.0
  %141 = vmatpush1.msra.mxu0 0.0
  %142 = vmatprep.subr.mxu0 0.0
  %143 = vmatpush1.msra.mxu0 0.0
  %144 = vmatprep.mubr.f32.mxu0 0.0
  %145 = vmatmul.mubr.f32.gmra.mrb[0].mxu0 %v57
  %v146 = vpop.f32.mrb[0].mxu0
  %v147 = vadd.f32 %v53, %v146
  %v148 = vpop.f32.mrb[0].mxu0
  %149 = vmatprep.mubr.f32.mxu0 0.0
  %150 = vmatmul.mubr.f32.gmra.mrb[0].mxu0 %v60
  %v151 = vpop.f32.mrb[0].mxu0
  %v152 = vadd.f32 %v53, %v151
  %v153 = vpop.f32.mrb[0].mxu0
  %154 = vmatprep.mubr.f32.mxu0 0.0
  %155 = vmatmul.mubr.f32.gmra.mrb[0].mxu0 %v63
  %v156 = vpop.f32.mrb[0].mxu0
  %v157 = vadd.f32 %v53, %v156
  %v158 = vpop.f32.mrb[0].mxu0
  %159 = vmatprep.mubr.f32.mxu0 0.0
  %160 = vmatmul.mubr.f32.gmra.mrb[0].mxu0 %v66
  %v161 = vpop.f32.mrb[0].mxu0
  %v162 = vadd.f32 %v53, %v161
  %v163 = vpop.f32.mrb[0].mxu0
  %164 = vmatprep.mubr.f32.mxu0 0.0
  %165 = vmatmul.mubr.f32.gmra.mrb[0].mxu0 %v69
  %v166 = vpop.f32.mrb[0].mxu0
  %v167 = vadd.f32 %v53, %v166
  %v168 = vpop.f32.mrb[0].mxu0
  %169 = vmatprep.mubr.f32.mxu0 0.0
  %170 = vmatmul.mubr.f32.gmra.mrb[0].mxu0 %v72
  %v171 = vpop.f32.mrb[0].mxu0
  %v172 = vadd.f32 %v53, %v171
  %v173 = vpop.f32.mrb[0].mxu0
  %174 = vmatprep.mubr.f32.mxu0 0.0
  %175 = vmatmul.mubr.f32.gmra.mrb[0].mxu0 %v75
  %v176 = vpop.f32.mrb[0].mxu0
  %v177 = vadd.f32 %v53, %v176
  %v178 = vpop.f32.mrb[0].mxu0
  %179 = vmatprep.mubr.f32.mxu0 0.0
  %180 = vmatmul.mubr.f32.gmra.mrb[0].mxu0 %v78
  %v181 = vpop.f32.mrb[0].mxu0
  %v182 = vadd.f32 %v53, %v181
  %v183 = vpop.f32.mrb[0].mxu0
  %184 = vdwg.mxu0
  %v185 = vld [vmem:[%s3] sm:$0xff]
  %v186 = vld [vmem:[%s3 + $0x8] sm:$0xff]
  %v187 = vld [vmem:[%s3 + $0x10] sm:$0xff]
  %v188 = vld [vmem:[%s3 + $0x18] sm:$0xff]
  %vm189 = vcmask 261120
  %v191 = vsel %vm189, %v39, 0
  %v194 = vsel %vm189, %v40, 0
  %v197 = vsel %vm189, %v41, 0
  %v200 = vsel %vm189, %v42, 0
  %v203 = vsel %vm189, %v43, 0
  %v206 = vsel %vm189, %v44, 0
  %v209 = vsel %vm189, %v45, 0
  %v212 = vsel %vm189, %v46, 0
  %214 = vmatprep.subr.mxu0 0.0
  %215 = vmatpush1.msra.mxu0 %v185
  %216 = vmatprep.subr.mxu0 0.0
  %217 = vmatpush1.msra.mxu0 %v186
  %218 = vmatprep.subr.mxu0 0.0
  %219 = vmatpush1.msra.mxu0 %v187
  %220 = vmatprep.subr.mxu0 0.0
  %221 = vmatpush1.msra.mxu0 %v188
  %222 = vmatprep.subr.mxu0 0.0
  %223 = vmatpush1.msra.mxu0 0.0
  %224 = vmatprep.subr.mxu0 0.0
  %225 = vmatpush1.msra.mxu0 0.0
  %226 = vmatprep.subr.mxu0 0.0
  %227 = vmatpush1.msra.mxu0 0.0
  %228 = vmatprep.subr.mxu0 0.0
  %229 = vmatpush1.msra.mxu0 0.0
  %230 = vmatprep.subr.mxu0 0.0
  %231 = vmatpush1.msra.mxu0 0.0
  %232 = vmatprep.subr.mxu0 0.0
  %233 = vmatpush1.msra.mxu0 0.0
  %234 = vmatprep.subr.mxu0 0.0
  %235 = vmatpush1.msra.mxu0 0.0
  %236 = vmatprep.subr.mxu0 0.0
  %237 = vmatpush1.msra.mxu0 0.0
  %238 = vmatprep.subr.mxu0 0.0
  %239 = vmatpush1.msra.mxu0 0.0
  %240 = vmatprep.subr.mxu0 0.0
  %241 = vmatpush1.msra.mxu0 0.0
  %242 = vmatprep.subr.mxu0 0.0
  %243 = vmatpush1.msra.mxu0 0.0
  %244 = vmatprep.subr.mxu0 0.0
  %245 = vmatpush1.msra.mxu0 0.0
  %246 = vmatprep.subr.mxu0 0.0
  %247 = vmatpush1.msra.mxu0 0.0
  %248 = vmatprep.subr.mxu0 0.0
  %249 = vmatpush1.msra.mxu0 0.0
  %250 = vmatprep.subr.mxu0 0.0
  %251 = vmatpush1.msra.mxu0 0.0
  %252 = vmatprep.subr.mxu0 0.0
  %253 = vmatpush1.msra.mxu0 0.0
  %254 = vmatprep.subr.mxu0 0.0
  %255 = vmatpush1.msra.mxu0 0.0
  %256 = vmatprep.subr.mxu0 0.0
  %257 = vmatpush1.msra.mxu0 0.0
  %258 = vmatprep.subr.mxu0 0.0
  %259 = vmatpush1.msra.mxu0 0.0
  %260 = vmatprep.subr.mxu0 0.0
  %261 = vmatpush1.msra.mxu0 0.0
  %262 = vmatprep.subr.mxu0 0.0
  %263 = vmatpush1.msra.mxu0 0.0
  %264 = vmatprep.subr.mxu0 0.0
  %265 = vmatpush1.msra.mxu0 0.0
  %266 = vmatprep.subr.mxu0 0.0
  %267 = vmatpush1.msra.mxu0 0.0
  %268 = vmatprep.subr.mxu0 0.0
  %269 = vmatpush1.msra.mxu0 0.0
  %270 = vmatprep.subr.mxu0 0.0
  %271 = vmatpush1.msra.mxu0 0.0
  %272 = vmatprep.subr.mxu0 0.0
  %273 = vmatpush1.msra.mxu0 0.0
  %274 = vmatprep.subr.mxu0 0.0
  %275 = vmatpush1.msra.mxu0 0.0
  %276 = vmatprep.subr.mxu0 0.0
  %277 = vmatpush1.msra.mxu0 0.0
  %278 = vmatprep.mubr.f32.mxu0 0.0
  %279 = vmatmul.mubr.f32.gmra.mrb[0].mxu0 %v191
  %v280 = vpop.f32.mrb[0].mxu0
  %v281 = vadd.f32 0.0, %v280
  %v282 = vpop.f32.mrb[0].mxu0
  %283 = vmatprep.mubr.f32.mxu0 0.0
  %284 = vmatmul.mubr.f32.gmra.mrb[0].mxu0 %v194
  %v285 = vpop.f32.mrb[0].mxu0
  %v286 = vadd.f32 0.0, %v285
  %v287 = vpop.f32.mrb[0].mxu0
  %288 = vmatprep.mubr.f32.mxu0 0.0
  %289 = vmatmul.mubr.f32.gmra.mrb[0].mxu0 %v197
  %v290 = vpop.f32.mrb[0].mxu0
  %v291 = vadd.f32 0.0, %v290
  %v292 = vpop.f32.mrb[0].mxu0
  %293 = vmatprep.mubr.f32.mxu0 0.0
  %294 = vmatmul.mubr.f32.gmra.mrb[0].mxu0 %v200
  %v295 = vpop.f32.mrb[0].mxu0
  %v296 = vadd.f32 0.0, %v295
  %v297 = vpop.f32.mrb[0].mxu0
  %298 = vmatprep.mubr.f32.mxu0 0.0
  %299 = vmatmul.mubr.f32.gmra.mrb[0].mxu0 %v203
  %v300 = vpop.f32.mrb[0].mxu0
  %v301 = vadd.f32 0.0, %v300
  %v302 = vpop.f32.mrb[0].mxu0
  %303 = vmatprep.mubr.f32.mxu0 0.0
  %304 = vmatmul.mubr.f32.gmra.mrb[0].mxu0 %v206
  %v305 = vpop.f32.mrb[0].mxu0
  %v306 = vadd.f32 0.0, %v305
  %v307 = vpop.f32.mrb[0].mxu0
  %308 = vmatprep.mubr.f32.mxu0 0.0
  %309 = vmatmul.mubr.f32.gmra.mrb[0].mxu0 %v209
  %v310 = vpop.f32.mrb[0].mxu0
  %v311 = vadd.f32 0.0, %v310
  %v312 = vpop.f32.mrb[0].mxu0
  %313 = vmatprep.mubr.f32.mxu0 0.0
  %314 = vmatmul.mubr.f32.gmra.mrb[0].mxu0 %v212
  %v315 = vpop.f32.mrb[0].mxu0
  %v316 = vadd.f32 0.0, %v315
  %v317 = vpop.f32.mrb[0].mxu0
  %318 = vdwg.mxu0
  %v319 = vadd.f32 %v147, %v281
  %v320 = vadd.f32 %v152, %v286
  %v321 = vadd.f32 %v157, %v291
  %v322 = vadd.f32 %v162, %v296
  %v323 = vadd.f32 %v167, %v301
  %v324 = vadd.f32 %v172, %v306
  %v325 = vadd.f32 %v177, %v311
  %v326 = vadd.f32 %v182, %v316
  %v327 = vxor.u32 %v319, 2147483648
  %v328 = vxor.u32 %v320, 2147483648
  %v329 = vxor.u32 %v321, 2147483648
  %v330 = vxor.u32 %v322, 2147483648
  %v331 = vxor.u32 %v323, 2147483648
  %v332 = vxor.u32 %v324, 2147483648
  %v333 = vxor.u32 %v325, 2147483648
  %v334 = vxor.u32 %v326, 2147483648
  %v335 = vmul.f32 %v327, 1.442695
  %v336 = vpow.pop %v335
  %v337 = vmul.f32 %v328, 1.442695
  %v338 = vpow.pop %v337
  %v339 = vmul.f32 %v329, 1.442695
  %v340 = vpow.pop %v339
  %v341 = vmul.f32 %v330, 1.442695
  %v342 = vpow.pop %v341
  %v343 = vmul.f32 %v331, 1.442695
  %v344 = vpow.pop %v343
  %v345 = vmul.f32 %v332, 1.442695
  %v346 = vpow.pop %v345
  %v347 = vmul.f32 %v333, 1.442695
  %v348 = vpow.pop %v347
  %v349 = vmul.f32 %v334, 1.442695
  %v350 = vpow.pop %v349
  %v351 = vadd.f32 %v336, 1.0
  %v352 = vadd.f32 %v338, 1.0
  %v353 = vadd.f32 %v340, 1.0
  %v354 = vadd.f32 %v342, 1.0
  %v355 = vadd.f32 %v344, 1.0
  %v356 = vadd.f32 %v346, 1.0
  %v357 = vadd.f32 %v348, 1.0
  %v358 = vadd.f32 %v350, 1.0
  %v359 = vrcp.pop %v351
  %v360 = vmul.f32 1.0, %v359
  %v361 = vrcp.pop %v352
  %v362 = vmul.f32 1.0, %v361
  %v363 = vrcp.pop %v353
  %v364 = vmul.f32 1.0, %v363
  %v365 = vrcp.pop %v354
  %v366 = vmul.f32 1.0, %v365
  %v367 = vrcp.pop %v355
  %v368 = vmul.f32 1.0, %v367
  %v369 = vrcp.pop %v356
  %v370 = vmul.f32 1.0, %v369
  %v371 = vrcp.pop %v357
  %v372 = vmul.f32 1.0, %v371
  %v373 = vrcp.pop %v358
  %v374 = vmul.f32 1.0, %v373
  %383 = vrot.lane.b32.xlu0 %v360, 96
  %v384 = vpop.permute.xlu0 %383
  %385 = vrot.lane.b32.xlu0 %v362, 96
  %v386 = vpop.permute.xlu0 %385
  %387 = vrot.lane.b32.xlu0 %v364, 96
  %v388 = vpop.permute.xlu0 %387
  %389 = vrot.lane.b32.xlu0 %v366, 96
  %v390 = vpop.permute.xlu0 %389
  %391 = vrot.lane.b32.xlu0 %v368, 96
  %v392 = vpop.permute.xlu0 %391
  %393 = vrot.lane.b32.xlu0 %v370, 96
  %v394 = vpop.permute.xlu0 %393
  %395 = vrot.lane.b32.xlu0 %v372, 96
  %v396 = vpop.permute.xlu0 %395
  %397 = vrot.lane.b32.xlu0 %v374, 96
  %v398 = vpop.permute.xlu0 %397
  %v407 = vmul.f32 %v39, %v384
  %v408 = vmul.f32 %v40, %v386
  %v409 = vmul.f32 %v41, %v388
  %v410 = vmul.f32 %v42, %v390
  %v411 = vmul.f32 %v43, %v392
  %v412 = vmul.f32 %v44, %v394
  %v413 = vmul.f32 %v45, %v396
  %v414 = vmul.f32 %v46, %v398
  %v415 = vld [vmem:[%s5] sm:$0xff]
  %v416 = vld [vmem:[%s5 + $0x8] sm:$0xff]
  %v417 = vld [vmem:[%s5 + $0x10] sm:$0xff]
  %v418 = vld [vmem:[%s5 + $0x18] sm:$0xff]
  %v420 = vsel %vm189, %v407, 0
  %v423 = vsel %vm189, %v408, 0
  %v426 = vsel %vm189, %v409, 0
  %v429 = vsel %vm189, %v410, 0
  %v432 = vsel %vm189, %v411, 0
  %v435 = vsel %vm189, %v412, 0
  %v438 = vsel %vm189, %v413, 0
  %v441 = vsel %vm189, %v414, 0
  %443 = vmatprep.subr.mxu0 0.0
  %444 = vmatpush1.msra.mxu0 %v415
  %445 = vmatprep.subr.mxu0 0.0
  %446 = vmatpush1.msra.mxu0 %v416
  %447 = vmatprep.subr.mxu0 0.0
  %448 = vmatpush1.msra.mxu0 %v417
  %449 = vmatprep.subr.mxu0 0.0
  %450 = vmatpush1.msra.mxu0 %v418
  %451 = vmatprep.subr.mxu0 0.0
  %452 = vmatpush1.msra.mxu0 0.0
  %453 = vmatprep.subr.mxu0 0.0
  %454 = vmatpush1.msra.mxu0 0.0
  %455 = vmatprep.subr.mxu0 0.0
  %456 = vmatpush1.msra.mxu0 0.0
  %457 = vmatprep.subr.mxu0 0.0
  %458 = vmatpush1.msra.mxu0 0.0
  %459 = vmatprep.subr.mxu0 0.0
  %460 = vmatpush1.msra.mxu0 0.0
  %461 = vmatprep.subr.mxu0 0.0
  %462 = vmatpush1.msra.mxu0 0.0
  %463 = vmatprep.subr.mxu0 0.0
  %464 = vmatpush1.msra.mxu0 0.0
  %465 = vmatprep.subr.mxu0 0.0
  %466 = vmatpush1.msra.mxu0 0.0
  %467 = vmatprep.subr.mxu0 0.0
  %468 = vmatpush1.msra.mxu0 0.0
  %469 = vmatprep.subr.mxu0 0.0
  %470 = vmatpush1.msra.mxu0 0.0
  %471 = vmatprep.subr.mxu0 0.0
  %472 = vmatpush1.msra.mxu0 0.0
  %473 = vmatprep.subr.mxu0 0.0
  %474 = vmatpush1.msra.mxu0 0.0
  %475 = vmatprep.subr.mxu0 0.0
  %476 = vmatpush1.msra.mxu0 0.0
  %477 = vmatprep.subr.mxu0 0.0
  %478 = vmatpush1.msra.mxu0 0.0
  %479 = vmatprep.subr.mxu0 0.0
  %480 = vmatpush1.msra.mxu0 0.0
  %481 = vmatprep.subr.mxu0 0.0
  %482 = vmatpush1.msra.mxu0 0.0
  %483 = vmatprep.subr.mxu0 0.0
  %484 = vmatpush1.msra.mxu0 0.0
  %485 = vmatprep.subr.mxu0 0.0
  %486 = vmatpush1.msra.mxu0 0.0
  %487 = vmatprep.subr.mxu0 0.0
  %488 = vmatpush1.msra.mxu0 0.0
  %489 = vmatprep.subr.mxu0 0.0
  %490 = vmatpush1.msra.mxu0 0.0
  %491 = vmatprep.subr.mxu0 0.0
  %492 = vmatpush1.msra.mxu0 0.0
  %493 = vmatprep.subr.mxu0 0.0
  %494 = vmatpush1.msra.mxu0 0.0
  %495 = vmatprep.subr.mxu0 0.0
  %496 = vmatpush1.msra.mxu0 0.0
  %497 = vmatprep.subr.mxu0 0.0
  %498 = vmatpush1.msra.mxu0 0.0
  %499 = vmatprep.subr.mxu0 0.0
  %500 = vmatpush1.msra.mxu0 0.0
  %501 = vmatprep.subr.mxu0 0.0
  %502 = vmatpush1.msra.mxu0 0.0
  %503 = vmatprep.subr.mxu0 0.0
  %504 = vmatpush1.msra.mxu0 0.0
  %505 = vmatprep.subr.mxu0 0.0
  %506 = vmatpush1.msra.mxu0 0.0
  %507 = vmatprep.mubr.f32.mxu0 0.0
  %508 = vmatmul.mubr.f32.gmra.mrb[0].mxu0 %v420
  %v509 = vpop.f32.mrb[0].mxu0
  %v510 = vadd.f32 0.0, %v509
  %v511 = vpop.f32.mrb[0].mxu0
  %512 = vmatprep.mubr.f32.mxu0 0.0
  %513 = vmatmul.mubr.f32.gmra.mrb[0].mxu0 %v423
  %v514 = vpop.f32.mrb[0].mxu0
  %v515 = vadd.f32 0.0, %v514
  %v516 = vpop.f32.mrb[0].mxu0
  %517 = vmatprep.mubr.f32.mxu0 0.0
  %518 = vmatmul.mubr.f32.gmra.mrb[0].mxu0 %v426
  %v519 = vpop.f32.mrb[0].mxu0
  %v520 = vadd.f32 0.0, %v519
  %v521 = vpop.f32.mrb[0].mxu0
  %522 = vmatprep.mubr.f32.mxu0 0.0
  %523 = vmatmul.mubr.f32.gmra.mrb[0].mxu0 %v429
  %v524 = vpop.f32.mrb[0].mxu0
  %v525 = vadd.f32 0.0, %v524
  %v526 = vpop.f32.mrb[0].mxu0
  %527 = vmatprep.mubr.f32.mxu0 0.0
  %528 = vmatmul.mubr.f32.gmra.mrb[0].mxu0 %v432
  %v529 = vpop.f32.mrb[0].mxu0
  %v530 = vadd.f32 0.0, %v529
  %v531 = vpop.f32.mrb[0].mxu0
  %532 = vmatprep.mubr.f32.mxu0 0.0
  %533 = vmatmul.mubr.f32.gmra.mrb[0].mxu0 %v435
  %v534 = vpop.f32.mrb[0].mxu0
  %v535 = vadd.f32 0.0, %v534
  %v536 = vpop.f32.mrb[0].mxu0
  %537 = vmatprep.mubr.f32.mxu0 0.0
  %538 = vmatmul.mubr.f32.gmra.mrb[0].mxu0 %v438
  %v539 = vpop.f32.mrb[0].mxu0
  %v540 = vadd.f32 0.0, %v539
  %v541 = vpop.f32.mrb[0].mxu0
  %542 = vmatprep.mubr.f32.mxu0 0.0
  %543 = vmatmul.mubr.f32.gmra.mrb[0].mxu0 %v441
  %v544 = vpop.f32.mrb[0].mxu0
  %v545 = vadd.f32 0.0, %v544
  %v546 = vpop.f32.mrb[0].mxu0
  %547 = vdwg.mxu0
  %556 = vrot.lane.b32.xlu0 %v510, 64
  %v557 = vpop.permute.xlu0 %556
  %558 = vrot.lane.b32.xlu0 %v515, 64
  %v559 = vpop.permute.xlu0 %558
  %560 = vrot.lane.b32.xlu0 %v520, 64
  %v561 = vpop.permute.xlu0 %560
  %562 = vrot.lane.b32.xlu0 %v525, 64
  %v563 = vpop.permute.xlu0 %562
  %564 = vrot.lane.b32.xlu0 %v530, 64
  %v565 = vpop.permute.xlu0 %564
  %566 = vrot.lane.b32.xlu0 %v535, 64
  %v567 = vpop.permute.xlu0 %566
  %568 = vrot.lane.b32.xlu0 %v540, 64
  %v569 = vpop.permute.xlu0 %568
  %570 = vrot.lane.b32.xlu0 %v545, 64
  %v571 = vpop.permute.xlu0 %570
  %v580 = vadd.f32 %v147, %v557
  %v581 = vadd.f32 %v152, %v559
  %v582 = vadd.f32 %v157, %v561
  %v583 = vadd.f32 %v162, %v563
  %v584 = vadd.f32 %v167, %v565
  %v585 = vadd.f32 %v172, %v567
  %v586 = vadd.f32 %v177, %v569
  %v587 = vadd.f32 %v182, %v571
  %v588 = vtanh.pop %v580
  %v589 = vtanh.pop %v581
  %v590 = vtanh.pop %v582
  %v591 = vtanh.pop %v583
  %v592 = vtanh.pop %v584
  %v593 = vtanh.pop %v585
  %v594 = vtanh.pop %v586
  %v595 = vtanh.pop %v587
  %v596 = vmul.f32 %v360, %v39
  %v597 = vmul.f32 %v362, %v40
  %v598 = vmul.f32 %v364, %v41
  %v599 = vmul.f32 %v366, %v42
  %v600 = vmul.f32 %v368, %v43
  %v601 = vmul.f32 %v370, %v44
  %v602 = vmul.f32 %v372, %v45
  %v603 = vmul.f32 %v374, %v46
  %v604 = vsub.f32 1.0, %v360
  %v605 = vsub.f32 1.0, %v362
  %v606 = vsub.f32 1.0, %v364
  %v607 = vsub.f32 1.0, %v366
  %v608 = vsub.f32 1.0, %v368
  %v609 = vsub.f32 1.0, %v370
  %v610 = vsub.f32 1.0, %v372
  %v611 = vsub.f32 1.0, %v374
  %620 = vrot.lane.b32.xlu0 %v588, 64
  %v621 = vpop.permute.xlu0 %620
  %622 = vrot.lane.b32.xlu0 %v589, 64
  %v623 = vpop.permute.xlu0 %622
  %624 = vrot.lane.b32.xlu0 %v590, 64
  %v625 = vpop.permute.xlu0 %624
  %626 = vrot.lane.b32.xlu0 %v591, 64
  %v627 = vpop.permute.xlu0 %626
  %628 = vrot.lane.b32.xlu0 %v592, 64
  %v629 = vpop.permute.xlu0 %628
  %630 = vrot.lane.b32.xlu0 %v593, 64
  %v631 = vpop.permute.xlu0 %630
  %632 = vrot.lane.b32.xlu0 %v594, 64
  %v633 = vpop.permute.xlu0 %632
  %634 = vrot.lane.b32.xlu0 %v595, 64
  %v635 = vpop.permute.xlu0 %634
  %v644 = vmul.f32 %v604, %v621
  %v645 = vmul.f32 %v605, %v623
  %v646 = vmul.f32 %v606, %v625
  %v647 = vmul.f32 %v607, %v627
  %v648 = vmul.f32 %v608, %v629
  %v649 = vmul.f32 %v609, %v631
  %v650 = vmul.f32 %v610, %v633
  %v651 = vmul.f32 %v611, %v635
  %v652 = vadd.f32 %v596, %v644
  %v653 = vadd.f32 %v597, %v645
  %v654 = vadd.f32 %v598, %v646
  %v655 = vadd.f32 %v599, %v647
  %v656 = vadd.f32 %v600, %v648
  %v657 = vadd.f32 %v601, %v649
  %v658 = vadd.f32 %v602, %v650
  %v659 = vadd.f32 %v603, %v651
  %v660 = vld [vmem:[%s6] sm:$0xff]
  %v661 = vld [vmem:[%s6 + $0x8] sm:$0xff]
  %v662 = vld [vmem:[%s6 + $0x10] sm:$0xff]
  %v663 = vld [vmem:[%s6 + $0x18] sm:$0xff]
  %v664 = vld [vmem:[%s7] sm:$0x1]
  %v666 = vlaneseq
  %v667 = vshrl.u32 %v666, 7
  %v668 = vsub.s32 0, %v667
  %v669 = vrot.slane %v664, %v668
  %v672 = vsel %vm189, %v652, 0
  %v675 = vsel %vm189, %v653, 0
  %v678 = vsel %vm189, %v654, 0
  %v681 = vsel %vm189, %v655, 0
  %v684 = vsel %vm189, %v656, 0
  %v687 = vsel %vm189, %v657, 0
  %v690 = vsel %vm189, %v658, 0
  %v693 = vsel %vm189, %v659, 0
  %695 = vmatprep.subr.mxu0 0.0
  %696 = vmatpush1.msra.mxu0 %v660
  %697 = vmatprep.subr.mxu0 0.0
  %698 = vmatpush1.msra.mxu0 %v661
  %699 = vmatprep.subr.mxu0 0.0
  %700 = vmatpush1.msra.mxu0 %v662
  %701 = vmatprep.subr.mxu0 0.0
  %702 = vmatpush1.msra.mxu0 %v663
  %703 = vmatprep.subr.mxu0 0.0
  %704 = vmatpush1.msra.mxu0 0.0
  %705 = vmatprep.subr.mxu0 0.0
  %706 = vmatpush1.msra.mxu0 0.0
  %707 = vmatprep.subr.mxu0 0.0
  %708 = vmatpush1.msra.mxu0 0.0
  %709 = vmatprep.subr.mxu0 0.0
  %710 = vmatpush1.msra.mxu0 0.0
  %711 = vmatprep.subr.mxu0 0.0
  %712 = vmatpush1.msra.mxu0 0.0
  %713 = vmatprep.subr.mxu0 0.0
  %714 = vmatpush1.msra.mxu0 0.0
  %715 = vmatprep.subr.mxu0 0.0
  %716 = vmatpush1.msra.mxu0 0.0
  %717 = vmatprep.subr.mxu0 0.0
  %718 = vmatpush1.msra.mxu0 0.0
  %719 = vmatprep.subr.mxu0 0.0
  %720 = vmatpush1.msra.mxu0 0.0
  %721 = vmatprep.subr.mxu0 0.0
  %722 = vmatpush1.msra.mxu0 0.0
  %723 = vmatprep.subr.mxu0 0.0
  %724 = vmatpush1.msra.mxu0 0.0
  %725 = vmatprep.subr.mxu0 0.0
  %726 = vmatpush1.msra.mxu0 0.0
  %727 = vmatprep.subr.mxu0 0.0
  %728 = vmatpush1.msra.mxu0 0.0
  %729 = vmatprep.subr.mxu0 0.0
  %730 = vmatpush1.msra.mxu0 0.0
  %731 = vmatprep.subr.mxu0 0.0
  %732 = vmatpush1.msra.mxu0 0.0
  %733 = vmatprep.subr.mxu0 0.0
  %734 = vmatpush1.msra.mxu0 0.0
  %735 = vmatprep.subr.mxu0 0.0
  %736 = vmatpush1.msra.mxu0 0.0
  %737 = vmatprep.subr.mxu0 0.0
  %738 = vmatpush1.msra.mxu0 0.0
  %739 = vmatprep.subr.mxu0 0.0
  %740 = vmatpush1.msra.mxu0 0.0
  %741 = vmatprep.subr.mxu0 0.0
  %742 = vmatpush1.msra.mxu0 0.0
  %743 = vmatprep.subr.mxu0 0.0
  %744 = vmatpush1.msra.mxu0 0.0
  %745 = vmatprep.subr.mxu0 0.0
  %746 = vmatpush1.msra.mxu0 0.0
  %747 = vmatprep.subr.mxu0 0.0
  %748 = vmatpush1.msra.mxu0 0.0
  %749 = vmatprep.subr.mxu0 0.0
  %750 = vmatpush1.msra.mxu0 0.0
  %751 = vmatprep.subr.mxu0 0.0
  %752 = vmatpush1.msra.mxu0 0.0
  %753 = vmatprep.subr.mxu0 0.0
  %754 = vmatpush1.msra.mxu0 0.0
  %755 = vmatprep.subr.mxu0 0.0
  %756 = vmatpush1.msra.mxu0 0.0
  %757 = vmatprep.subr.mxu0 0.0
  %758 = vmatpush1.msra.mxu0 0.0
  %759 = vmatprep.mubr.f32.mxu0 0.0
  %760 = vmatmul.mubr.f32.gmra.mrb[0].mxu0 %v672
  %v761 = vpop.f32.mrb[0].mxu0
  %v762 = vadd.f32 %v669, %v761
  %v763 = vpop.f32.mrb[0].mxu0
  %764 = vmatprep.mubr.f32.mxu0 0.0
  %765 = vmatmul.mubr.f32.gmra.mrb[0].mxu0 %v675
  %v766 = vpop.f32.mrb[0].mxu0
  %v767 = vadd.f32 %v669, %v766
  %v768 = vpop.f32.mrb[0].mxu0
  %769 = vmatprep.mubr.f32.mxu0 0.0
  %770 = vmatmul.mubr.f32.gmra.mrb[0].mxu0 %v678
  %v771 = vpop.f32.mrb[0].mxu0
  %v772 = vadd.f32 %v669, %v771
  %v773 = vpop.f32.mrb[0].mxu0
  %774 = vmatprep.mubr.f32.mxu0 0.0
  %775 = vmatmul.mubr.f32.gmra.mrb[0].mxu0 %v681
  %v776 = vpop.f32.mrb[0].mxu0
  %v777 = vadd.f32 %v669, %v776
  %v778 = vpop.f32.mrb[0].mxu0
  %779 = vmatprep.mubr.f32.mxu0 0.0
  %780 = vmatmul.mubr.f32.gmra.mrb[0].mxu0 %v684
  %v781 = vpop.f32.mrb[0].mxu0
  %v782 = vadd.f32 %v669, %v781
  %v783 = vpop.f32.mrb[0].mxu0
  %784 = vmatprep.mubr.f32.mxu0 0.0
  %785 = vmatmul.mubr.f32.gmra.mrb[0].mxu0 %v687
  %v786 = vpop.f32.mrb[0].mxu0
  %v787 = vadd.f32 %v669, %v786
  %v788 = vpop.f32.mrb[0].mxu0
  %789 = vmatprep.mubr.f32.mxu0 0.0
  %790 = vmatmul.mubr.f32.gmra.mrb[0].mxu0 %v690
  %v791 = vpop.f32.mrb[0].mxu0
  %v792 = vadd.f32 %v669, %v791
  %v793 = vpop.f32.mrb[0].mxu0
  %794 = vmatprep.mubr.f32.mxu0 0.0
  %795 = vmatmul.mubr.f32.gmra.mrb[0].mxu0 %v693
  %v796 = vpop.f32.mrb[0].mxu0
  %v797 = vadd.f32 %v669, %v796
  %v798 = vpop.f32.mrb[0].mxu0
  %799 = vdwg.mxu0
  %800 = vst.msk [vmem:[%s8] sm:$0xff] %vm55, %v762
  %801 = vst.msk [vmem:[%s8 + $0x8] sm:$0xff] %vm55, %v767
  %802 = vst.msk [vmem:[%s8 + $0x10] sm:$0xff] %vm55, %v772
  %803 = vst.msk [vmem:[%s8 + $0x18] sm:$0xff] %vm55, %v777
  %804 = vst.msk [vmem:[%s8 + $0x20] sm:$0xff] %vm55, %v782
  %805 = vst.msk [vmem:[%s8 + $0x28] sm:$0xff] %vm55, %v787
  %806 = vst.msk [vmem:[%s8 + $0x30] sm:$0xff] %vm55, %v792
  %807 = vst.msk [vmem:[%s8 + $0x38] sm:$0xff] %vm55, %v797
  %808 = vst.msk [vmem:[%s9] sm:$0xff] %vm189, %v652
  %809 = vst.msk [vmem:[%s9 + $0x8] sm:$0xff] %vm189, %v653
  %810 = vst.msk [vmem:[%s9 + $0x10] sm:$0xff] %vm189, %v654
  %811 = vst.msk [vmem:[%s9 + $0x18] sm:$0xff] %vm189, %v655
  %812 = vst.msk [vmem:[%s9 + $0x20] sm:$0xff] %vm189, %v656
  %813 = vst.msk [vmem:[%s9 + $0x28] sm:$0xff] %vm189, %v657
  %814 = vst.msk [vmem:[%s9 + $0x30] sm:$0xff] %vm189, %v658
  %815 = vst.msk [vmem:[%s9 + $0x38] sm:$0xff] %vm189, %v659
  // Predicated region
  $region34: #{tgnn_forward.1} parent=0 // pred_check
    _
  $region35: #{tgnn_forward.1} parent=0 // pred_check_branch
    %817 = sbr.rel (0) target = $region37
  $region36: #{tgnn_forward.1} parent=0 // pred_region
    _
  $region37: #{tgnn_forward.1} parent=0 // pred_fallthru
    _
  // Predicated region
  $region38: #{tgnn_forward.1} parent=0 // pred_check
    _
  $region39: #{tgnn_forward.1} parent=0 // pred_check_branch
    %819 = sbr.rel (0) target = $region41
  $region40: #{tgnn_forward.1} parent=0 // pred_region
    _
  $region41: #{tgnn_forward.1} parent=0 // pred_fallthru
    _
  // Predicated region
  $region42: #{tgnn_forward.1} parent=0 // pred_check
    _
  $region43: #{tgnn_forward.1} parent=0 // pred_check_branch
    %821 = sbr.rel (0) target = $region45
  $region44: #{tgnn_forward.1} parent=0 // pred_region
    _
  $region45: #{tgnn_forward.1} parent=0 // pred_fallthru
    _
  // Predicated region
  $region46: #{tgnn_forward.1} parent=0 // pred_check
    _
  $region47: #{tgnn_forward.1} parent=0 // pred_check_branch
    %823 = sbr.rel (0) target = $region49
  $region48: #{tgnn_forward.1} parent=0 // pred_region
    _
  $region49: #{tgnn_forward.1} parent=0 // pred_fallthru
    _

</llo_original>
